<compile_context>
chip_gen: v5e
topology: v5e:2x2
jax: 0.10.0
libtpu: 0.0.40
codegen_flags: <defaults>
</compile_context>

<pallas_src>
import functools
import math

import jax
import jax.numpy as jnp
from jax.experimental import pallas as pl
from jax.experimental.pallas import tpu as pltpu


_LANES = 128                      # vreg lane width (last dim)
_SUBLANES = 8                     # vreg sublane depth (second-to-last dim)
_VREG_ELEMS = _SUBLANES * _LANES  # 1024 elements per f32 vreg
_NPAR = 2                         # parallel grid shards (v7x: 2 TensorCores)
_CHUNK_ROWS = 512                 # in-kernel sub-tile rows (bounds VMEM temps)
_TARGET_BLOCK_BYTES = 8 * 1024 * 1024   # ~8 MiB streamed per input per step
_VMEM_LIMIT_BYTES = 48 * 1024 * 1024    # 2 in x 2 buf x 8 MiB = 32 MiB + slack
_XLA_FALLBACK_BYTES = 2 * 1024 * 1024   # below this, fused XLA beats pallas_call


def _cdiv(a, b):
    return (a + b - 1) // b


def _make_partial_sum_kernel(br, nc, rows_valid, needs_mask, chunk):
    """Build the kernel body for a given (static) tiling.

    Accumulates a lane-dense (8, 128) partial sum of (pred - gt)^2 into the
    resident output block of the current parallel shard.  The block is
    processed in `chunk`-row sub-tiles so intermediates stay small even when
    the streaming block is 8 MiB.
    """
    n_full = br // chunk
    rem = br - n_full * chunk     # multiple of 8 by construction

    def kernel(pred_ref, gt_ref, out_ref):
        k = pl.program_id(1)

        @pl.when(k == 0)
        def _():
            out_ref[...] = jnp.zeros_like(out_ref)

        # Unclamped global row offset of this grid step (used only for the
        # validity mask; the DMA itself uses the clamped index_map).
        base_row = (pl.program_id(0) * nc + k) * br

        def accum(r0, nrows, acc):
            pv = pred_ref[pl.ds(r0, nrows), :].astype(jnp.float32)
            gv = gt_ref[pl.ds(r0, nrows), :].astype(jnp.float32)
            d = pv - gv
            sq = d * d
            if needs_mask:
                rid = base_row + r0 + jax.lax.broadcasted_iota(
                    jnp.int32, (nrows, _LANES), 0)
                sq = jnp.where(rid < rows_valid, sq, 0.0)
            # Fold sublane groups: (nrows,128) -> (nrows//8, 8, 128) and sum
            # the leading axis.  Tile-aligned, lowers to pure vreg+vreg VPU
            # adds; no XLU inside the streaming loop.
            return acc + jnp.sum(
                sq.reshape(nrows // _SUBLANES, _SUBLANES, _LANES), axis=0)

        acc = jnp.zeros((_SUBLANES, _LANES), jnp.float32)
        if n_full == 1:
            acc = accum(0, chunk, acc)
        elif n_full > 1:
            def body(c, a):
                r0 = pl.multiple_of(c * chunk, chunk)
                return accum(r0, chunk, a)
            unroll = True if n_full <= 8 else 4
            acc = jax.lax.fori_loop(0, n_full, body, acc, unroll=unroll)
        if rem:
            acc = accum(n_full * chunk, rem, acc)

        out_ref[...] += acc

    return kernel


def _xla_loss(pred_img, gt_img):
    d = pred_img.astype(jnp.float32) - gt_img.astype(jnp.float32)
    per_sample = jnp.sum(d * d, axis=tuple(range(1, pred_img.ndim)))
    return 0.05 * jnp.mean(per_sample)


def l2_loss_wae(pred_img, gt_img, *, force_pallas=False,
                block_bytes=_TARGET_BLOCK_BYTES):
    """Pallas implementation of L2LossWrapperWAE.forward."""
    assert pred_img.shape == gt_img.shape
    assert pred_img.dtype == gt_img.dtype
    B = pred_img.shape[0]
    n_elems = math.prod(pred_img.shape)
    itemsize = jnp.dtype(pred_img.dtype).itemsize

    # Small inputs: the fixed pallas_call cost dominates — let XLA fuse it.
    if not force_pallas and n_elems * itemsize < _XLA_FALLBACK_BYTES:
        return _xla_loss(pred_img, gt_img)

    # ---- Flatten (metadata-only for contiguous inputs); no padding ----
    pred_flat = pred_img.reshape(-1)
    gt_flat = gt_img.reshape(-1)

    # Whole-vreg prefix handled by the kernel; sub-1024-element tail in XLA.
    rows = (n_elems // _VREG_ELEMS) * _SUBLANES     # always a multiple of 8
    main_n = rows * _LANES
    tail = n_elems - main_n

    tail_sum = jnp.float32(0.0)
    if tail:
        # TODO(synk): the prefix/tail slices may materialize a copy for
        # non-vreg-divisible sizes; rare for image tensors and bounded.
        pt = pred_flat[main_n:].astype(jnp.float32)
        gtl = gt_flat[main_n:].astype(jnp.float32)
        tail_sum = jnp.sum((pt - gtl) ** 2)
        pred_flat = pred_flat[:main_n]
        gt_flat = gt_flat[:main_n]

    if rows == 0:
        return (0.05 / B) * tail_sum

    pred2 = pred_flat.reshape(rows, _LANES)
    gt2 = gt_flat.reshape(rows, _LANES)

    # ---- Tiling: ~block_bytes per input per step, 2 parallel shards ----
    target_br = max(_SUBLANES,
                    (block_bytes // (_LANES * itemsize)) // _SUBLANES * _SUBLANES)
    if target_br > _CHUNK_ROWS:
        target_br = (target_br // _CHUNK_ROWS) * _CHUNK_ROWS
    br = min(target_br, rows)                 # multiple of 8 (rows is too)
    nb = _cdiv(rows, br)                      # total row-blocks
    npar = _NPAR if nb >= _NPAR else 1        # shard across TCs on v7x
    nc = _cdiv(nb, npar)                      # steps per shard
    needs_mask = (npar * nc * br != rows)     # ragged tail or duplicate step
    chunk = min(_CHUNK_ROWS, br)

    kernel = _make_partial_sum_kernel(br, nc, rows, needs_mask, chunk)

    def in_map(p, k):
        # Clamp steps that would run past the last block; the clamped step
        # repeats the previous block index (no extra DMA) and is fully masked.
        return (jnp.minimum(p * nc + k, nb - 1), 0)

    cost = pl.CostEstimate(
        flops=3 * main_n,                     # sub + mul + add
        transcendentals=0,
        bytes_accessed=2 * main_n * itemsize + npar * _SUBLANES * _LANES * 4,
    )

    partials = pl.pallas_call(
        kernel,
        out_shape=jax.ShapeDtypeStruct((npar * _SUBLANES, _LANES), jnp.float32),
        grid_spec=pltpu.PrefetchScalarGridSpec(
            num_scalar_prefetch=0,
            grid=(npar, nc),
            in_specs=[
                pl.BlockSpec((br, _LANES), in_map),
                pl.BlockSpec((br, _LANES), in_map),
            ],
            out_specs=pl.BlockSpec((_SUBLANES, _LANES), lambda p, k: (p, 0)),
        ),
        compiler_params=pltpu.CompilerParams(
            dimension_semantics=("parallel", "arbitrary"),
            vmem_limit_bytes=_VMEM_LIMIT_BYTES,
        ),
        cost_estimate=cost,
    )(pred2, gt2)

    # Single cross-lane reduce + constant scale, once, in the wrapper:
    # 0.05 * mean_b(sum_chw diff^2) == (0.05 / B) * sum_all(diff^2)
    return (0.05 / B) * (jnp.sum(partials) + tail_sum)


if __name__ == "__main__":
    key = jax.random.PRNGKey(0)

    def _ref(pred, gt):
        d = pred.astype(jnp.float32) - gt.astype(jnp.float32)
        return 0.05 * jnp.mean(jnp.sum(d * d, axis=(1, 2, 3)))

    f_pallas = jax.jit(functools.partial(l2_loss_wae, force_pallas=True))

    # 1) Small NCHW demo (divides evenly into (8,128) vregs).
    k1, k2, k3, k4 = jax.random.split(key, 4)
    pred = jax.random.normal(k1, (2, 4, 16, 16), dtype=jnp.float32)
    gt = jax.random.normal(k2, (2, 4, 16, 16), dtype=jnp.float32)
    loss = jax.block_until_ready(f_pallas(pred, gt))
    assert jnp.allclose(loss, _ref(pred, gt), rtol=1e-5, atol=1e-5), \
        (loss, _ref(pred, gt))

    # 2) Ragged element count: exercises the <1024-element XLA tail path.
    pred2 = jax.random.normal(k3, (2, 3, 15, 17), dtype=jnp.float32)
    gt2 = jax.random.normal(k4, (2, 3, 15, 17), dtype=jnp.float32)
    loss2 = jax.block_until_ready(f_pallas(pred2, gt2))
    assert jnp.allclose(loss2, _ref(pred2, gt2), rtol=1e-5, atol=1e-5), \
        (loss2, _ref(pred2, gt2))

    # 3) Tiny block override: exercises partial-last-block masking and the
    #    clamped index_map on a 2-shard grid (the paths large inputs hit).
    k5, k6 = jax.random.split(k1)
    pred3 = jax.random.normal(k5, (2, 4, 20, 32), dtype=jnp.float32)
    gt3 = jax.random.normal(k6, (2, 4, 20, 32), dtype=jnp.float32)
    f_small_blocks = jax.jit(functools.partial(
        l2_loss_wae, force_pallas=True, block_bytes=8 * 1024))
    loss3 = jax.block_until_ready(f_small_blocks(pred3, gt3))
    assert jnp.allclose(loss3, _ref(pred3, gt3), rtol=1e-5, atol=1e-5), \
        (loss3, _ref(pred3, gt3))

    print("KERNEL_OK")
</pallas_src>

<mosaic_0001>
module attributes {stable_mosaic.version = 11 : i64} {
  func.func @kernel(%arg0: i32, %arg1: i32, %arg2: memref<16x128xf32, #tpu.memory_space<vmem>>, %arg3: memref<16x128xf32, #tpu.memory_space<vmem>>, %arg4: memref<8x128xf32, #tpu.memory_space<vmem>>) attributes {dimension_semantics = [#tpu.dimension_semantics<parallel>, #tpu.dimension_semantics<arbitrary>], iteration_bounds = array<i64: 1, 1>, scalar_prefetch = 0 : i64, scratch_operands = 0 : i64, tpu.core_type = #tpu.core_type<tc>, window_params = [{transform_indices = @transform_0, window_bounds = array<i64: 16, 128>}, {transform_indices = @transform_1, window_bounds = array<i64: 16, 128>}, {transform_indices = @transform_2, window_bounds = array<i64: 8, 128>}]} {
    %c0_i32 = arith.constant 0 : i32
    %0 = arith.cmpi eq, %arg1, %c0_i32 : i32
    %1 = arith.extui %0 : i1 to i32
    %c0_i32_0 = arith.constant 0 : i32
    %2 = arith.cmpi ne, %1, %c0_i32_0 : i32
    scf.if %2 {
      %cst_9 = arith.constant 0.000000e+00 : f32
      %14 = vector.broadcast %cst_9 : f32 to vector<8x128xf32>
      %c0_10 = arith.constant 0 : index
      %c0_11 = arith.constant 0 : index
      %15 = vector.load %arg4[%c0_10, %c0_11] : memref<8x128xf32, #tpu.memory_space<vmem>>, vector<8x128xf32>
      tpu.vector_store %arg4[%c0_10, %c0_11], %14 {strides = array<i32>} : memref<8x128xf32, #tpu.memory_space<vmem>>, vector<8x128xf32>,
    } else {
    }
    %cst = arith.constant 0.000000e+00 : f32
    %3 = vector.broadcast %cst : f32 to vector<8x128xf32>
    %c0 = arith.constant 0 : index
    %c0_1 = arith.constant 0 : index
    %4 = vector.load %arg2[%c0, %c0_1] : memref<16x128xf32, #tpu.memory_space<vmem>>, vector<16x128xf32>
    %c0_2 = arith.constant 0 : index
    %c0_3 = arith.constant 0 : index
    %5 = vector.load %arg3[%c0_2, %c0_3] : memref<16x128xf32, #tpu.memory_space<vmem>>, vector<16x128xf32>
    %6 = arith.subf %4, %5 : vector<16x128xf32>
    %7 = arith.mulf %6, %6 : vector<16x128xf32>
    %8 = vector.shape_cast %7 : vector<16x128xf32> to vector<2x8x128xf32>
    %cst_4 = arith.constant dense<0.000000e+00> : vector<8x128xf32>
    %9 = vector.multi_reduction <add>, %8, %cst_4 [0] : vector<2x8x128xf32> to vector<8x128xf32>
    %10 = arith.addf %3, %9 : vector<8x128xf32>
    %c0_5 = arith.constant 0 : index
    %c0_6 = arith.constant 0 : index
    %11 = vector.load %arg4[%c0_5, %c0_6] : memref<8x128xf32, #tpu.memory_space<vmem>>, vector<8x128xf32>
    %12 = arith.addf %11, %10 : vector<8x128xf32>
    %c0_7 = arith.constant 0 : index
    %c0_8 = arith.constant 0 : index
    %13 = vector.load %arg4[%c0_7, %c0_8] : memref<8x128xf32, #tpu.memory_space<vmem>>, vector<8x128xf32>
    tpu.vector_store %arg4[%c0_7, %c0_8], %12 {strides = array<i32>} : memref<8x128xf32, #tpu.memory_space<vmem>>, vector<8x128xf32>,
    return
  }
  func.func @transform_0(%arg0: i32, %arg1: i32) -> (i32, i32) {
    %c1_i32 = arith.constant 1 : i32
    %0 = arith.muli %arg0, %c1_i32 : i32
    %1 = arith.addi %0, %arg1 : i32
    %c0_i32 = arith.constant 0 : i32
    %2 = arith.minsi %1, %c0_i32 : i32
    %c0_i32_0 = arith.constant 0 : i32
    %c0_i32_1 = arith.constant 0 : i32
    return %2, %c0_i32_0 : i32, i32
  }
  func.func @transform_1(%arg0: i32, %arg1: i32) -> (i32, i32) {
    %c1_i32 = arith.constant 1 : i32
    %0 = arith.muli %arg0, %c1_i32 : i32
    %1 = arith.addi %0, %arg1 : i32
    %c0_i32 = arith.constant 0 : i32
    %2 = arith.minsi %1, %c0_i32 : i32
    %c0_i32_0 = arith.constant 0 : i32
    %c0_i32_1 = arith.constant 0 : i32
    return %2, %c0_i32_0 : i32, i32
  }
  func.func @transform_2(%arg0: i32, %arg1: i32) -> (i32, i32) {
    %c0_i32 = arith.constant 0 : i32
    %c0_i32_0 = arith.constant 0 : i32
    return %arg0, %c0_i32 : i32, i32
  }
}

</mosaic_0001>

<llo_original>
// kernel: l2_loss_wae.1
$region0: #{l2_loss_wae.1}
  #allocation0 [shape = 'u32[]', space=smem, size = 0x4, offset = 0x4, fixed_abs, tag = 'smem constant byte address 0x4 - core index']
  #allocation1 [shape = 'u32[72,128]{1,0:T(1,128)}', space=vmem, size = 0x9000, scoped, tag = 'internal scratch']
  %s0 = inlined_call_operand.vmem [shape: f32[16,128], index: 0, kind: input, shape index: {}]
  %s1 = inlined_call_operand.vmem [shape: f32[16,128], index: 1, kind: input, shape index: {}]
  %s2 = inlined_call_operand.vmem [shape: f32[8,128], index: 2, kind: output, shape index: {}]
  %s3 = sld [smem:[#allocation0]]
  $region22: #{l2_loss_wae.1} parent=0
    _
  %s5 = ssub.s32 1, %s3
  %s6 = scalar_select 0, %s5, %s3
  // Predicated region
  $region2: #{l2_loss_wae.1} parent=0 // pred_check
    _
  $region3: #{l2_loss_wae.1} parent=0 // pred_check_branch
    %8 = sbr.rel (0) target = $region5
  $region4: #{l2_loss_wae.1} parent=0 // pred_region
    %s9 = sadd.s32 0, 0
    %p10 = scmp.lt.s32.totalorder %s9, 0
    %s11 = scalar_select %p10, %s9, 0
    %s12 = smul.u32 2, %s11
    %p13 = scmp.lt.s32.totalorder %s12, 1
    %s14 = scalar_select %p13, %s12, 1
    %s15 = smul.addr %s14, 8
    %s16 = scalar_lea.vmem %s0, %s15
    %s17 = sadd.s32 0, 0
    %p18 = scmp.lt.s32.totalorder %s17, 0
    %s19 = scalar_select %p18, %s17, 0
    %s20 = smul.u32 2, %s19
  $region5: #{l2_loss_wae.1} parent=0 // pred_fallthru
    _
  // Predicated region
  $region6: #{l2_loss_wae.1} parent=0 // pred_check
    _
  $region7: #{l2_loss_wae.1} parent=0 // pred_check_branch
    %22 = sbr.rel (0) target = $region9
  $region8: #{l2_loss_wae.1} parent=0 // pred_region
    %s23 = sadd.s32 0, 0
    %p24 = scmp.lt.s32.totalorder %s23, 0
    %s25 = scalar_select %p24, %s23, 0
    %s26 = smul.u32 2, %s25
    %p27 = scmp.lt.s32.totalorder %s26, 1
    %s28 = scalar_select %p27, %s26, 1
    %s29 = smul.addr %s28, 8
    %s30 = scalar_lea.vmem %s1, %s29
    %s31 = sadd.s32 0, 0
    %p32 = scmp.lt.s32.totalorder %s31, 0
    %s33 = scalar_select %p32, %s31, 0
    %s34 = smul.u32 2, %s33
  $region9: #{l2_loss_wae.1} parent=0 // pred_fallthru
    _
  %s35 = sadd.s32 0, 0
  %p36 = scmp.lt.s32.totalorder %s35, 0
  %s37 = scalar_select %p36, %s35, 0
  %s38 = smul.u32 2, %s37
  %p39 = scmp.lt.s32.totalorder %s38, 1
  %s40 = scalar_select %p39, %s38, 1
  %s41 = smul.addr %s40, 8
  %s42 = scalar_lea.vmem %s0, %s41
  %s43 = sadd.s32 0, 0
  %p44 = scmp.lt.s32.totalorder %s43, 0
  %s45 = scalar_select %p44, %s43, 0
  %s46 = smul.u32 2, %s45
  %p47 = scmp.lt.s32.totalorder %s46, 1
  %s48 = scalar_select %p47, %s46, 1
  %s49 = smul.addr %s48, 8
  %s50 = scalar_lea.vmem %s1, %s49
  %s51 = sadd.s32 0, 0
  %p52 = scmp.lt.s32.totalorder %s51, 0
  %s53 = scalar_select %p52, %s51, 0
  %s54 = smul.u32 2, %s53
  %p55 = scmp.lt.s32.totalorder %s54, 1
  %s56 = scalar_select %p55, %s54, 1
  %s57 = smul.addr %s56, 8
  %s58 = scalar_lea.vmem %s0, %s57
  %s59 = sadd.s32 0, 0
  %p60 = scmp.lt.s32.totalorder %s59, 0
  %s61 = scalar_select %p60, %s59, 0
  %s62 = smul.u32 2, %s61
  %s63 = sadd.s32 0, 0
  %p64 = scmp.lt.s32.totalorder %s63, 0
  %s65 = scalar_select %p64, %s63, 0
  %s66 = smul.u32 2, %s65
  %p67 = scmp.lt.s32.totalorder %s66, 1
  %s68 = scalar_select %p67, %s66, 1
  %s69 = smul.addr %s68, 8
  %s70 = scalar_lea.vmem %s1, %s69
  %s71 = sadd.s32 0, 0
  %p72 = scmp.lt.s32.totalorder %s71, 0
  %s73 = scalar_select %p72, %s71, 0
  %s74 = smul.u32 2, %s73
  %p75 = scmp.eq.s32.totalorder 0, 0
  // Predicated region
  $region10: #{l2_loss_wae.1} parent=0 // pred_check
    %p76 = pneg %p75
  $region11: #{l2_loss_wae.1} parent=0 // pred_check_branch
    %78 = sbr.rel (%p76) target = $region13
  $region12: #{l2_loss_wae.1} parent=0 // pred_region
    %79 = vst [vmem:[%s2] sm:$0xff] 0.0
  $region13: #{l2_loss_wae.1} parent=0 // pred_fallthru
    _
  %v80 = vld [vmem:[%s58] sm:$0xff]
  %v81 = vld [vmem:[%s58 + $0x8] sm:$0xff]
  %v82 = vld [vmem:[%s70] sm:$0xff]
  %v83 = vld [vmem:[%s70 + $0x8] sm:$0xff]
  %v84 = vsub.f32 %v80, %v82
  %v85 = vsub.f32 %v81, %v83
  %v86 = vmul.f32 %v84, %v84
  %v87 = vmul.f32 %v85, %v85
  %v88 = vadd.f32 %v86, %v87
  %v89 = vadd.f32 %v88, 0.0
  %v90 = vld [vmem:[%s2] sm:$0xff]
  %v91 = vadd.f32 %v90, %v89
  %92 = vst [vmem:[%s2] sm:$0xff] %v91
  // Predicated region
  $region14: #{l2_loss_wae.1} parent=0 // pred_check
    _
  $region15: #{l2_loss_wae.1} parent=0 // pred_check_branch
    %94 = sbr.rel (0) target = $region17
  $region16: #{l2_loss_wae.1} parent=0 // pred_region
    _
  $region17: #{l2_loss_wae.1} parent=0 // pred_fallthru
    _
  // Predicated region
  $region18: #{l2_loss_wae.1} parent=0 // pred_check
    _
  $region19: #{l2_loss_wae.1} parent=0 // pred_check_branch
    %96 = sbr.rel (0) target = $region21
  $region20: #{l2_loss_wae.1} parent=0 // pred_region
    _
  $region21: #{l2_loss_wae.1} parent=0 // pred_fallthru
    _

</llo_original>
